<compile_context>
chip_gen: v7x
topology: tpu7x:2x2x1
jax: 0.10.0
libtpu: 0.0.40
codegen_flags: <defaults>
</compile_context>

<pallas_src>
import jax
import jax.numpy as jnp
from jax.experimental import pallas as pl
from jax.experimental.pallas import tpu as pltpu


_LANE = 128
_MAX_LANES = 16 * 1024          # cap on flattened lane width (8K-32K sweet spot)


# --------------------------------------------------------------------------
# Kernel: one (tm, cols) tile of  out = x + relu(y)   (VPU elementwise)
# --------------------------------------------------------------------------
def _identity_residual_gate_kernel(x_ref, y_ref, o_ref):
    o_ref[...] = x_ref[...] + jnp.maximum(y_ref[...], 0)


# --------------------------------------------------------------------------
# Helpers
# --------------------------------------------------------------------------
def _sublane_pack(dtype):
    # f32 -> 8, bf16/f16 -> 16, int8/fp8 -> 32 sublanes per packed vreg row.
    itemsize = jnp.dtype(dtype).itemsize
    return max(8, 32 // max(1, itemsize))


def _vmem_limit_bytes():
    # Per-generation scoped-VMEM budget: 3/4 of physical, capped at 100 MiB.
    #   v5e/v6e: 128 MiB physical -> 96 MiB ;  v7x: 64 MiB/TC -> 48 MiB.
    try:
        cap = int(pltpu.get_tpu_info().vmem_capacity_bytes)
    except Exception:
        cap = 64 * 1024 * 1024  # conservative fallback (v7x per-TensorCore)
    return min((cap * 3) // 4, 100 * 1024 * 1024)


def _lane_dense_cols(n, last_dim):
    """Largest multiple of 128 that divides n (capped); else fall back."""
    if n >= _LANE and n % _LANE == 0:
        f = n // _LANE
        for k in range(min(f, _MAX_LANES // _LANE), 0, -1):
            if f % k == 0:
                return _LANE * k
    return max(1, last_dim)


def _pick_row_tile(rows, row_bytes, sublane, max_tile_bytes):
    if rows <= sublane:
        return rows               # single block == full dim -> layout-legal
    budget_rows = max(1, max_tile_bytes // max(1, row_bytes))
    half = -(-rows // 2)          # cdiv(rows, 2): aim for >= 2 grid steps (v7x)
    tm = min(rows, half, budget_rows)
    tm = -(-tm // sublane) * sublane   # round up to the dtype sublane pack
    return tm


# --------------------------------------------------------------------------
# Wrapper
# --------------------------------------------------------------------------
def identity_residual_gate(x, y, *, min_pallas_bytes=256 * 1024, donate_x=False):
    assert x.shape == y.shape, "IdentityResidualGate expects x and y same shape"
    assert x.dtype == y.dtype

    itemsize = jnp.dtype(x.dtype).itemsize
    total_bytes = x.size * itemsize

    # Small-input fast path: XLA's fused elementwise op already sits at
    # roofline; pallas_call dispatch + grid-step overhead would only add cost.
    if total_bytes < min_pallas_bytes or x.size == 0:
        return x + jnp.maximum(y, 0)

    orig_shape = x.shape
    n = x.size
    last_dim = orig_shape[-1] if x.ndim >= 1 else 1

    cols = _lane_dense_cols(n, last_dim)      # lane-dense whenever possible
    rows = max(1, n // cols)
    x2 = x.reshape(rows, cols)
    y2 = y.reshape(rows, cols)

    vmem_limit = _vmem_limit_bytes()
    # 2 inputs + 1 output, each double-buffered => ~6x tile bytes of scoped
    # VMEM; divide by 8 to leave headroom for sublane rounding / compiler temps.
    max_tile_bytes = max(1, vmem_limit // 8)
    sublane = _sublane_pack(x.dtype)
    tm = _pick_row_tile(rows, cols * itemsize, sublane, max_tile_bytes)
    grid = (pl.cdiv(rows, tm),)               # ragged last block is masked

    spec = pl.BlockSpec((tm, cols), lambda i: (i, 0))

    extra = {}
    if donate_x:
        extra["input_output_aliases"] = {0: 0}

    out2 = pl.pallas_call(
        _identity_residual_gate_kernel,
        out_shape=jax.ShapeDtypeStruct((rows, cols), x.dtype),
        grid=grid,
        in_specs=[spec, spec],
        out_specs=spec,
        compiler_params=pltpu.CompilerParams(
            dimension_semantics=("parallel",),   # independent steps -> both TCs on v7x
            vmem_limit_bytes=vmem_limit,
        ),
        **extra,
    )(x2, y2)

    return out2.reshape(orig_shape)


# --------------------------------------------------------------------------
# Pure-JAX reference (mirrors the PyTorch module: x + F.relu(y))
# --------------------------------------------------------------------------
def ref_identity_residual_gate(x, y):
    return x + jnp.maximum(y, 0)


def _check(out, ref, name, atol=1e-6):
    if not jnp.allclose(out.astype(jnp.float32), ref.astype(jnp.float32),
                        atol=atol, rtol=atol):
        err = float(jnp.max(jnp.abs(out.astype(jnp.float32)
                                    - ref.astype(jnp.float32))))
        raise AssertionError(f"{name}: mismatch vs reference, max abs err {err}")


if __name__ == "__main__":
    key = jax.random.PRNGKey(0)
    keys = jax.random.split(key, 8)

    # 1) Small demo shape (seq=8, batch=2, d_model=32); force the Pallas path.
    x = jax.random.normal(keys[0], (8, 2, 32), jnp.float32)
    y = jax.random.normal(keys[1], (8, 2, 32), jnp.float32)
    out = jax.block_until_ready(identity_residual_gate(x, y, min_pallas_bytes=0))
    assert out.shape == x.shape and out.dtype == x.dtype
    _check(out, ref_identity_residual_gate(x, y), "small/pallas")

    # 2) Shape whose flattened size has no large 128-multiple factor
    #    -> lane-dense reshape gives rows=131, multi-step ragged grid.
    x2 = jax.random.normal(keys[2], (131, 2, 64), jnp.float32)
    y2 = jax.random.normal(keys[3], (131, 2, 64), jnp.float32)
    out2 = jax.block_until_ready(identity_residual_gate(x2, y2, min_pallas_bytes=0))
    _check(out2, ref_identity_residual_gate(x2, y2), "ragged/lane-dense")

    # 3) Size not divisible by 128 -> fallback (rows, last_dim) layout.
    x3 = jax.random.normal(keys[4], (8, 2, 33), jnp.float32)
    y3 = jax.random.normal(keys[5], (8, 2, 33), jnp.float32)
    out3 = jax.block_until_ready(identity_residual_gate(x3, y3, min_pallas_bytes=0))
    _check(out3, ref_identity_residual_gate(x3, y3), "fallback-layout")

    # 4) Default-threshold Pallas path on a medium tensor (1 MiB per array).
    x4 = jax.random.normal(keys[6], (256, 8, 128), jnp.float32)
    y4 = jax.random.normal(keys[7], (256, 8, 128), jnp.float32)
    out4 = jax.block_until_ready(identity_residual_gate(x4, y4))
    _check(out4, ref_identity_residual_gate(x4, y4), "medium/default")

    # 5) Small-input fast path (no pallas_call) still matches.
    out5 = jax.block_until_ready(identity_residual_gate(x, y))
    _check(out5, ref_identity_residual_gate(x, y), "small/fast-path")

    print("KERNEL_OK")
</pallas_src>

<mosaic_0001>
module attributes {stable_mosaic.version = 11 : i64} {
  func.func @_identity_residual_gate_kernel(%arg0: i32, %arg1: memref<1x512xf32, #tpu.memory_space<vmem>>, %arg2: memref<1x512xf32, #tpu.memory_space<vmem>>, %arg3: memref<1x512xf32, #tpu.memory_space<vmem>>) attributes {dimension_semantics = [#tpu.dimension_semantics<parallel>], iteration_bounds = array<i64: 1>, scalar_prefetch = 0 : i64, scratch_operands = 0 : i64, tpu.core_type = #tpu.core_type<tc>, window_params = [{transform_indices = @transform_0, window_bounds = array<i64: 1, 512>}, {transform_indices = @transform_1, window_bounds = array<i64: 1, 512>}, {transform_indices = @transform_2, window_bounds = array<i64: 1, 512>}]} {
    %c0 = arith.constant 0 : index
    %c0_0 = arith.constant 0 : index
    %0 = vector.load %arg1[%c0, %c0_0] : memref<1x512xf32, #tpu.memory_space<vmem>>, vector<1x512xf32>
    %c0_1 = arith.constant 0 : index
    %c0_2 = arith.constant 0 : index
    %1 = vector.load %arg2[%c0_1, %c0_2] : memref<1x512xf32, #tpu.memory_space<vmem>>, vector<1x512xf32>
    %cst = arith.constant 0.000000e+00 : f32
    %2 = vector.broadcast %cst : f32 to vector<1x512xf32>
    %3 = arith.maximumf %1, %2 : vector<1x512xf32>
    %4 = arith.addf %0, %3 : vector<1x512xf32>
    %c0_3 = arith.constant 0 : index
    %c0_4 = arith.constant 0 : index
    %5 = vector.load %arg3[%c0_3, %c0_4] : memref<1x512xf32, #tpu.memory_space<vmem>>, vector<1x512xf32>
    tpu.vector_store %arg3[%c0_3, %c0_4], %4 {strides = array<i32>} : memref<1x512xf32, #tpu.memory_space<vmem>>, vector<1x512xf32>,
    return
  }
  func.func @transform_0(%arg0: i32) -> (i32, i32) {
    %c0_i32 = arith.constant 0 : i32
    %c0_i32_0 = arith.constant 0 : i32
    return %arg0, %c0_i32 : i32, i32
  }
  func.func @transform_1(%arg0: i32) -> (i32, i32) {
    %c0_i32 = arith.constant 0 : i32
    %c0_i32_0 = arith.constant 0 : i32
    return %arg0, %c0_i32 : i32, i32
  }
  func.func @transform_2(%arg0: i32) -> (i32, i32) {
    %c0_i32 = arith.constant 0 : i32
    %c0_i32_0 = arith.constant 0 : i32
    return %arg0, %c0_i32 : i32, i32
  }
}

</mosaic_0001>

<llo_original>
// kernel: tpu_custom_call.1
$region0: #{tpu_custom_call.1}
  #allocation0 [shape = 'u32[]', space=smem, size = 0x4, offset = 0x4, fixed_abs, tag = 'smem constant byte address 0x4 - core index']
  #allocation1 [shape = 'u32[144,128]{1,0:T(1,128)}', space=vmem, size = 0x12000, scoped, tag = 'internal scratch']
  %s0 = inlined_call_operand.hbm [shape: f32[1,512], index: 0, kind: input, shape index: {}]
  %s1 = inlined_call_operand.hbm [shape: f32[1,512], index: 1, kind: input, shape index: {}]
  %s2 = inlined_call_operand.hbm [shape: f32[1,512], index: 2, kind: output, shape index: {}]
  %s3 = sld [smem:[#allocation0]]
  $region26: #{tpu_custom_call.1} parent=0
    _
  %s5 = ssub.s32 1, %s3
  %s6 = scalar_select 0, %s5, %s3
  $region1: #{tpu_custom_call.1} parent=0
    #allocation2 [shape = 'u8[2048]{0}', space=vmem, size = 0x800, scoped, tag = 'input window, operand 0, single buffered']
    #allocation3 [shape = 's32[1]{0}', space=sflag, size = 0x4, scoped, tag = 'scoped memory for tpu_custom_call.1']
    #allocation4 [shape = 's32[1]{0}', space=sflag, size = 0x4, scoped, tag = 'scoped memory for tpu_custom_call.1']
    #allocation5 [shape = 'u8[2048]{0}', space=vmem, size = 0x800, scoped, tag = 'input window, operand 1, single buffered']
    #allocation6 [shape = 's32[1]{0}', space=sflag, size = 0x4, scoped, tag = 'scoped memory for tpu_custom_call.1']
    #allocation7 [shape = 'u8[2048]{0}', space=vmem, size = 0x800, scoped, tag = 'output window, operand 0, single buffered']
    %7 = vsyncpa [#allocation3], 0
    %8 = vsyncpa [#allocation6], 0
    %9 = vsyncpa [#allocation4], 0
    // Predicated region
    $region2: #{tpu_custom_call.1} parent=1 // pred_check
      _
    $region3: #{tpu_custom_call.1} parent=1 // pred_check_branch
      %11 = sbr.rel (0) target = $region5
    $region4: #{tpu_custom_call.1} parent=1 // pred_region
      %s13 = ssub.s32 64, 64
      %14 = vsyncadd [#allocation3], %s13
      %s16 = sshll.u32 [#allocation2], 4
      %s17 = int_to_ptr.vmem [resolvable:$true] %s16
      %19 = dma.hbm_to_vmem [thread:$0]  %s0, 64, %s17, [#allocation3]
    $region5: #{tpu_custom_call.1} parent=1 // pred_fallthru
      _
    // Predicated region
    $region6: #{tpu_custom_call.1} parent=1 // pred_check
      _
    $region7: #{tpu_custom_call.1} parent=1 // pred_check_branch
      %21 = sbr.rel (0) target = $region9
    $region8: #{tpu_custom_call.1} parent=1 // pred_region
      %s23 = ssub.s32 64, 64
      %24 = vsyncadd [#allocation6], %s23
      %s26 = sshll.u32 [#allocation5], 4
      %s27 = int_to_ptr.vmem [resolvable:$true] %s26
      %29 = dma.hbm_to_vmem [thread:$0]  %s1, 64, %s27, [#allocation6]
    $region9: #{tpu_custom_call.1} parent=1 // pred_fallthru
      _
    // Predicated region
    $region10: #{tpu_custom_call.1} parent=1 // pred_check
      _
    $region11: #{tpu_custom_call.1} parent=1 // pred_check_branch
      %31 = sbr.rel (0) target = $region13
    $region12: #{tpu_custom_call.1} parent=1 // pred_region
      %32 = dma.done [#allocation3], 64
    $region13: #{tpu_custom_call.1} parent=1 // pred_fallthru
      _
    // Predicated region
    $region14: #{tpu_custom_call.1} parent=1 // pred_check
      _
    $region15: #{tpu_custom_call.1} parent=1 // pred_check_branch
      %34 = sbr.rel (0) target = $region17
    $region16: #{tpu_custom_call.1} parent=1 // pred_region
      %35 = dma.done [#allocation6], 64
    $region17: #{tpu_custom_call.1} parent=1 // pred_fallthru
      _
    %v36 = vld [vmem:[#allocation2] sm:$0xf]
    %v37 = vld [vmem:[#allocation5] sm:$0xf]
    %v38 = vmax.f32 %v37, 0.0
    %v39 = vadd.f32 %v36, %v38
    %v40 = vlaneseq
    %vm41 = vcmp.ge.s32.totalorder %v40, 0
    %vm42 = vcmp.lt.s32.totalorder %v40, 512
    %vm43 = vmand %vm41, %vm42
    %44 = vst.msk [vmem:[#allocation7] sm:$0xf] %vm43, %v39
    // Predicated region
    $region18: #{tpu_custom_call.1} parent=1 // pred_check
      _
    $region19: #{tpu_custom_call.1} parent=1 // pred_check_branch
      %46 = sbr.rel (0) target = $region21
    $region20: #{tpu_custom_call.1} parent=1 // pred_region
      %s48 = ssub.s32 64, 64
      %49 = vsyncadd [#allocation4], %s48
      %s51 = sshll.u32 [#allocation7], 4
      %s52 = int_to_ptr.vmem [resolvable:$true] %s51
      %54 = dma.vmem_to_hbm [thread:$0]  %s52, 64, %s2, [#allocation4]
    $region21: #{tpu_custom_call.1} parent=1 // pred_fallthru
      _
    // Predicated region
    $region22: #{tpu_custom_call.1} parent=1 // pred_check
      _
    $region23: #{tpu_custom_call.1} parent=1 // pred_check_branch
      %56 = sbr.rel (0) target = $region25
    $region24: #{tpu_custom_call.1} parent=1 // pred_region
      %57 = dma.done [#allocation4], 64
    $region25: #{tpu_custom_call.1} parent=1 // pred_fallthru
      _
    %58 = vsyncpa [#allocation3], 1
    %59 = vsyncpa [#allocation6], 1
    %60 = vsyncpa [#allocation4], 1

</llo_original>
